<compile_context>
chip_gen: v7x
topology: tpu7x:2x2x1
jax: 0.10.0
libtpu: 0.0.40
codegen_flags: <defaults>
</compile_context>

<pallas_src>
import jax
import jax.numpy as jnp
from jax.experimental import pallas as pl
from jax.experimental.pallas import tpu as pltpu


def _split_conv_kernel(x_ref, ws_ref, wp_ref, bs_ref, bp_ref, s_ref, p_ref):
    # x_ref: (1, C, T) tile of the (N, C, H*W) feature.
    # 1x1 conv == per-pixel matmul in NCHW:  y = W @ x + b, with W pre-split
    # into the "shared" rows W_s (C, C) and "private" rows W_p (C, C) so each
    # half is a single MXU dot writing a lane-dense output tile.
    x = x_ref[0]                                                     # (C, T)
    s = jnp.dot(ws_ref[...], x, preferred_element_type=jnp.float32) + bs_ref[...]
    p = jnp.dot(wp_ref[...], x, preferred_element_type=jnp.float32) + bp_ref[...]
    s_ref[0] = s.astype(s_ref.dtype)
    p_ref[0] = p.astype(p_ref.dtype)


def _pick_tile_hw(hw, max_tile=2048):
    """Largest legal spatial tile: whole HW if small, else the biggest
    multiple-of-128 divisor of HW that is <= max_tile (full HW as fallback,
    which is always a legal block extent)."""
    if hw <= max_tile:
        return hw
    t = (max_tile // 128) * 128
    while t >= 128:
        if hw % t == 0:
            return t
        t -= 128
    return hw


def split_1x1_conv(feat_nchw, w_oi, b_o):
    """Conv2d(dim, 2*dim, kernel_size=1)(feat).chunk(2, dim=1) in Pallas.

    feat_nchw: (N, C, H, W) float32
    w_oi:      (2C, C)  -- PyTorch conv weight (out, in), 1x1 spatial squeezed
    b_o:       (2C,)
    Returns (shared, private), each (N, C, H, W), NCHW like the torch module.
    """
    n, c, h, w = feat_nchw.shape
    assert w_oi.shape == (2 * c, c)
    hw = h * w

    # Free views only -- no transpose passes through HBM.
    x = feat_nchw.reshape(n, c, hw)
    w_s, w_p = w_oi[:c], w_oi[c:]                  # (C, C) each
    b_s = b_o[:c].reshape(c, 1)                    # broadcast over lanes
    b_p = b_o[c:].reshape(c, 1)

    tile_hw = _pick_tile_hw(hw)
    grid = (n, hw // tile_hw)

    shared_f, private_f = pl.pallas_call(
        _split_conv_kernel,
        out_shape=(jax.ShapeDtypeStruct((n, c, hw), feat_nchw.dtype),
                   jax.ShapeDtypeStruct((n, c, hw), feat_nchw.dtype)),
        grid_spec=pltpu.PrefetchScalarGridSpec(
            num_scalar_prefetch=0,
            grid=grid,
            in_specs=[
                pl.BlockSpec((1, c, tile_hw), lambda i, j: (i, 0, j)),  # x tile
                pl.BlockSpec((c, c), lambda i, j: (0, 0)),              # W_s (resident)
                pl.BlockSpec((c, c), lambda i, j: (0, 0)),              # W_p (resident)
                pl.BlockSpec((c, 1), lambda i, j: (0, 0)),              # b_s
                pl.BlockSpec((c, 1), lambda i, j: (0, 0)),              # b_p
            ],
            out_specs=[
                pl.BlockSpec((1, c, tile_hw), lambda i, j: (i, 0, j)),  # shared
                pl.BlockSpec((1, c, tile_hw), lambda i, j: (i, 0, j)),  # private
            ],
        ),
        compiler_params=pltpu.CompilerParams(
            dimension_semantics=("parallel", "parallel")),
    )(x, w_s, w_p, b_s, b_p)

    return shared_f.reshape(n, c, h, w), private_f.reshape(n, c, h, w)


class SharedPrivateEncoderPallas:
    """Pallas port of SharedPrivateEncoder: per-stage split = Conv2d(dim, 2*dim, 1)."""

    def __init__(self, embed_dim, key):
        self.out_dims = [embed_dim * 2 ** i for i in range(4)]
        self.params = []
        for i, dim in enumerate(self.out_dims):
            kw, kb = jax.random.split(jax.random.fold_in(key, i))
            # deterministic init (PyTorch Conv2d-style uniform bounds, fan_in = dim for 1x1)
            bound = 1.0 / (dim ** 0.5)
            wgt = jax.random.uniform(kw, (2 * dim, dim), jnp.float32, -bound, bound)
            bias = jax.random.uniform(kb, (2 * dim,), jnp.float32, -bound, bound)
            self.params.append((wgt, bias))

    def __call__(self, feats):
        shared, private = [], []
        for i, f in enumerate(feats):
            s, p = split_1x1_conv(f, *self.params[i])
            shared.append(s)
            private.append(p)
        return shared, private


def _reference_split(feat_nchw, w_oi, b_o):
    # pure-JAX reference: 1x1 conv as einsum over channels, then chunk(2, dim=1)
    y = jnp.einsum('nchw,oc->nohw', feat_nchw, w_oi,
                   preferred_element_type=jnp.float32) + b_o[None, :, None, None]
    c = feat_nchw.shape[1]
    return y[:, :c], y[:, c:]


if __name__ == "__main__":
    key = jax.random.PRNGKey(0)
    k_feats, k_params = jax.random.split(key)

    batch, embed_dim, img = 2, 8, 64           # stages see img/4, img/8, img/16, img/32
    out_dims = [embed_dim * 2 ** i for i in range(4)]
    spatials = [img // (4 * 2 ** i) for i in range(4)]   # 16, 8, 4, 2

    feats = []
    for i, (dim, s) in enumerate(zip(out_dims, spatials)):
        feats.append(jax.random.normal(jax.random.fold_in(k_feats, i),
                                       (batch, dim, s, s), jnp.float32))

    enc = SharedPrivateEncoderPallas(embed_dim, k_params)
    shared, private = enc(feats)
    jax.block_until_ready(shared)
    jax.block_until_ready(private)

    # correctness check against pure-JAX reference
    for i, f in enumerate(feats):
        s_ref, p_ref = _reference_split(f, *enc.params[i])
        assert shared[i].shape == f.shape and private[i].shape == f.shape
        assert jnp.allclose(shared[i], s_ref, atol=1e-4, rtol=1e-4)
        assert jnp.allclose(private[i], p_ref, atol=1e-4, rtol=1e-4)

    print("KERNEL_OK")
</pallas_src>

<mosaic_0001>
module attributes {stable_mosaic.version = 11 : i64} {
  func.func @_split_conv_kernel(%arg0: i32, %arg1: i32, %arg2: memref<1x8x256xf32, #tpu.memory_space<vmem>>, %arg3: memref<8x8xf32, #tpu.memory_space<vmem>>, %arg4: memref<8x8xf32, #tpu.memory_space<vmem>>, %arg5: memref<8x1xf32, #tpu.memory_space<vmem>>, %arg6: memref<8x1xf32, #tpu.memory_space<vmem>>, %arg7: memref<1x8x256xf32, #tpu.memory_space<vmem>>, %arg8: memref<1x8x256xf32, #tpu.memory_space<vmem>>) attributes {dimension_semantics = [#tpu.dimension_semantics<parallel>, #tpu.dimension_semantics<parallel>], iteration_bounds = array<i64: 2, 1>, scalar_prefetch = 0 : i64, scratch_operands = 0 : i64, tpu.core_type = #tpu.core_type<tc>, window_params = [{transform_indices = @transform_0, window_bounds = array<i64: 1, 8, 256>}, {pipeline_mode = #tpu.pipeline_mode<synchronous>, transform_indices = @transform_1, window_bounds = array<i64: 8, 8>}, {pipeline_mode = #tpu.pipeline_mode<synchronous>, transform_indices = @transform_2, window_bounds = array<i64: 8, 8>}, {pipeline_mode = #tpu.pipeline_mode<synchronous>, transform_indices = @transform_3, window_bounds = array<i64: 8, 1>}, {pipeline_mode = #tpu.pipeline_mode<synchronous>, transform_indices = @transform_4, window_bounds = array<i64: 8, 1>}, {transform_indices = @transform_5, window_bounds = array<i64: 1, 8, 256>}, {transform_indices = @transform_6, window_bounds = array<i64: 1, 8, 256>}]} {
    %c0 = arith.constant 0 : index
    %c0_0 = arith.constant 0 : index
    %c0_1 = arith.constant 0 : index
    %0 = vector.load %arg2[%c0, %c0_0, %c0_1] : memref<1x8x256xf32, #tpu.memory_space<vmem>>, vector<1x8x256xf32>
    %1 = vector.shape_cast %0 : vector<1x8x256xf32> to vector<8x256xf32>
    %c0_2 = arith.constant 0 : index
    %c0_3 = arith.constant 0 : index
    %2 = vector.load %arg3[%c0_2, %c0_3] : memref<8x8xf32, #tpu.memory_space<vmem>>, vector<8x8xf32>
    %cst = arith.constant dense<0.000000e+00> : vector<8x256xf32>
    %3 = tpu.matmul %2, %1, %cst {dimension_numbers = #tpu.dot_dimension_numbers<[1], [0], [0], [1], [0, 0, 1, 1], [], []>} : vector<8x8xf32>, vector<8x256xf32>, vector<8x256xf32> -> vector<8x256xf32>
    %c0_4 = arith.constant 0 : index
    %c0_5 = arith.constant 0 : index
    %4 = vector.load %arg5[%c0_4, %c0_5] : memref<8x1xf32, #tpu.memory_space<vmem>>, vector<8x1xf32>
    %5 = vector.broadcast %4 : vector<8x1xf32> to vector<8x256xf32>
    %6 = arith.addf %3, %5 : vector<8x256xf32>
    %c0_6 = arith.constant 0 : index
    %c0_7 = arith.constant 0 : index
    %7 = vector.load %arg4[%c0_6, %c0_7] : memref<8x8xf32, #tpu.memory_space<vmem>>, vector<8x8xf32>
    %cst_8 = arith.constant dense<0.000000e+00> : vector<8x256xf32>
    %8 = tpu.matmul %7, %1, %cst_8 {dimension_numbers = #tpu.dot_dimension_numbers<[1], [0], [0], [1], [0, 0, 1, 1], [], []>} : vector<8x8xf32>, vector<8x256xf32>, vector<8x256xf32> -> vector<8x256xf32>
    %c0_9 = arith.constant 0 : index
    %c0_10 = arith.constant 0 : index
    %9 = vector.load %arg6[%c0_9, %c0_10] : memref<8x1xf32, #tpu.memory_space<vmem>>, vector<8x1xf32>
    %10 = vector.broadcast %9 : vector<8x1xf32> to vector<8x256xf32>
    %11 = arith.addf %8, %10 : vector<8x256xf32>
    %c0_11 = arith.constant 0 : index
    %c0_12 = arith.constant 0 : index
    %c0_13 = arith.constant 0 : index
    %12 = vector.load %arg7[%c0_11, %c0_12, %c0_13] : memref<1x8x256xf32, #tpu.memory_space<vmem>>, vector<1x8x256xf32>
    %13 = vector.shape_cast %12 : vector<1x8x256xf32> to vector<8x256xf32>
    %14 = vector.shape_cast %6 : vector<8x256xf32> to vector<1x8x256xf32>
    tpu.vector_store %arg7[%c0_11, %c0_12, %c0_13], %14 {strides = array<i32>} : memref<1x8x256xf32, #tpu.memory_space<vmem>>, vector<1x8x256xf32>,
    %c0_14 = arith.constant 0 : index
    %c0_15 = arith.constant 0 : index
    %c0_16 = arith.constant 0 : index
    %15 = vector.load %arg8[%c0_14, %c0_15, %c0_16] : memref<1x8x256xf32, #tpu.memory_space<vmem>>, vector<1x8x256xf32>
    %16 = vector.shape_cast %15 : vector<1x8x256xf32> to vector<8x256xf32>
    %17 = vector.shape_cast %11 : vector<8x256xf32> to vector<1x8x256xf32>
    tpu.vector_store %arg8[%c0_14, %c0_15, %c0_16], %17 {strides = array<i32>} : memref<1x8x256xf32, #tpu.memory_space<vmem>>, vector<1x8x256xf32>,
    return
  }
  func.func @transform_0(%arg0: i32, %arg1: i32) -> (i32, i32, i32) {
    %c0_i32 = arith.constant 0 : i32
    %c0_i32_0 = arith.constant 0 : i32
    return %arg0, %c0_i32, %arg1 : i32, i32, i32
  }
  func.func @transform_1(%arg0: i32, %arg1: i32) -> (i32, i32) {
    %c0_i32 = arith.constant 0 : i32
    %c0_i32_0 = arith.constant 0 : i32
    %c0_i32_1 = arith.constant 0 : i32
    return %c0_i32, %c0_i32_0 : i32, i32
  }
  func.func @transform_2(%arg0: i32, %arg1: i32) -> (i32, i32) {
    %c0_i32 = arith.constant 0 : i32
    %c0_i32_0 = arith.constant 0 : i32
    %c0_i32_1 = arith.constant 0 : i32
    return %c0_i32, %c0_i32_0 : i32, i32
  }
  func.func @transform_3(%arg0: i32, %arg1: i32) -> (i32, i32) {
    %c0_i32 = arith.constant 0 : i32
    %c0_i32_0 = arith.constant 0 : i32
    %c0_i32_1 = arith.constant 0 : i32
    return %c0_i32, %c0_i32_0 : i32, i32
  }
  func.func @transform_4(%arg0: i32, %arg1: i32) -> (i32, i32) {
    %c0_i32 = arith.constant 0 : i32
    %c0_i32_0 = arith.constant 0 : i32
    %c0_i32_1 = arith.constant 0 : i32
    return %c0_i32, %c0_i32_0 : i32, i32
  }
  func.func @transform_5(%arg0: i32, %arg1: i32) -> (i32, i32, i32) {
    %c0_i32 = arith.constant 0 : i32
    %c0_i32_0 = arith.constant 0 : i32
    return %arg0, %c0_i32, %arg1 : i32, i32, i32
  }
  func.func @transform_6(%arg0: i32, %arg1: i32) -> (i32, i32, i32) {
    %c0_i32 = arith.constant 0 : i32
    %c0_i32_0 = arith.constant 0 : i32
    return %arg0, %c0_i32, %arg1 : i32, i32, i32
  }
}

</mosaic_0001>

<llo_original>
// kernel: tpu_custom_call.1
$region0: #{tpu_custom_call.1}
  #allocation0 [shape = 'u32[]', space=smem, size = 0x4, offset = 0x4, fixed_abs, tag = 'smem constant byte address 0x4 - core index']
  #allocation1 [shape = 'u32[144,128]{1,0:T(1,128)}', space=vmem, size = 0x12000, scoped, tag = 'internal scratch']
  %s0 = inlined_call_operand.hbm [shape: f32[2,8,256], index: 0, kind: input, shape index: {}]
  %s1 = inlined_call_operand.vmem [shape: f32[8,8], index: 1, kind: input, shape index: {}]
  %s2 = inlined_call_operand.vmem [shape: f32[8,8], index: 2, kind: input, shape index: {}]
  %s3 = inlined_call_operand.vmem [shape: f32[8,1], index: 3, kind: input, shape index: {}]
  %s4 = inlined_call_operand.vmem [shape: f32[8,1], index: 4, kind: input, shape index: {}]
  %s5 = inlined_call_operand.hbm [shape: f32[2,8,256], index: 5, kind: output, shape index: {0}]
  %s6 = inlined_call_operand.hbm [shape: f32[2,8,256], index: 6, kind: output, shape index: {1}]
  %7 = xla_tuple %s5, %s6
  %s8 = sld [smem:[#allocation0]]
  $region65: #{tpu_custom_call.1} parent=0
    _
  %s10 = ssub.s32 1, %s8
  %s11 = scalar_select 0, %s10, %s8
  $region1: #{tpu_custom_call.1} parent=0
    #allocation2 [shape = 'u8[16384]{0}', space=vmem, size = 0x4000, scoped, tag = 'input window, operand 0']
    #allocation3 [shape = 's32[2]{0}', space=sflag, size = 0x8, scoped, tag = 'scoped memory for tpu_custom_call.1']
    #allocation4 [shape = 's32[2]{0}', space=sflag, size = 0x8, scoped, tag = 'scoped memory for tpu_custom_call.1']
    #allocation5 [shape = 'u8[16384]{0}', space=vmem, size = 0x4000, scoped, tag = 'output window, operand 0']
    #allocation6 [shape = 'u8[16384]{0}', space=vmem, size = 0x4000, scoped, tag = 'output window, operand 1']
    #allocation7 [shape = 's32[2]{0}', space=sflag, size = 0x8, scoped, tag = 'scoped memory for tpu_custom_call.1']
    %12 = vsyncpa [#allocation3], 0
    %s13 = scalar_lea.sflag [#allocation3], 1
    %14 = vsyncpa %s13, 0
    %15 = vsyncpa [#allocation4], 0
    %s16 = scalar_lea.sflag [#allocation4], 1
    %17 = vsyncpa %s16, 0
    %18 = vsyncpa [#allocation7], 0
    %s19 = scalar_lea.sflag [#allocation7], 1
    %20 = vsyncpa %s19, 0
    loop: start=0, step=1, limit=4
    $region2: #{tpu_custom_call.1} parent=1 // loop_pre_header
      _
    $region3: #{tpu_custom_call.1} parent=1 // loop_header
      %s22 = sphi 0, %s26
      %p23 = scmp.ge.s32.totalorder %s22, 4
      %s29 = sphi 0, %s41
      %s30 = sphi 0, %s37
      %s31 = sphi 0, %s29
      %s32 = sphi 0, %s30
      %s33 = sphi 0, %s31
      %s34 = sphi 0, %s32
      %s46 = sphi 0, %s48
      %s49 = sphi 0, %s46
      %s50 = sphi 0, %s49
      %s66 = sphi 0, %s50
      %s70 = sphi 0, %s70
      %s72 = sphi 0, %s70
      %s73 = sphi 0, %s72
      %s87 = sphi 0, %s73
      %s91 = sphi 0, %s91
      %s93 = sphi 0, %s91
      %s94 = sphi 0, %s93
      %s108 = sphi 0, %s94
      %s112 = sphi 0, %s112
      %s114 = sphi 0, %s112
      %s115 = sphi 0, %s114
      %s129 = sphi 0, %s115
      %s133 = sphi 0, %s133
      %s135 = sphi 0, %s133
      %s136 = sphi 0, %s135
      %s150 = sphi 0, %s136
      %s158 = sphi 0, %s160
      %s161 = sphi 0, %s158
      %s162 = sphi 0, %s161
      %s178 = sphi 0, %s162
      %s186 = sphi 0, %s188
      %s189 = sphi 0, %s186
      %s190 = sphi 0, %s189
      %s206 = sphi 0, %s190
    $region4: #{tpu_custom_call.1} parent=1 // loop_header_branch
      %25 = sbr.rel (%p23) target = $region8
    $region5: #{tpu_custom_call.1} parent=1 // loop_body
      %s27 = ssub.s32 %s22, 1
      %s28 = ssub.s32 %s22, 2
      %s35 = sadd.s32 1, %s30
      %p36 = scmp.ge.s32.totalorder %s35, 1
      %s37 = scalar_select %p36, 0, %s35
      %s38 = sadd.s32 1, %s29
      %s39 = scalar_select %p36, %s38, %s29
      %p40 = scmp.ge.s32.totalorder %s39, 2
      %s41 = scalar_select %p40, 0, %s39
      %s42 = ssub.s32 %s29, %s41
      %s43 = ssub.s32 %s30, %s37
      %s44 = sor.u32 %s42, %s43
      %p45 = scmp.eq.s32.totalorder %s44, 0
      %s47 = sadd.s32 %s46, 1
      %s48 = scalar_select %p45, %s46, %s47
      %p51 = pneg %p45
      %p52 = scmp.eq.s32.totalorder %s22, 1
      %p53 = por %p51, %p52
      %p54 = scmp.ne.s32.totalorder %s46, %s49
      %p55 = scmp.eq.s32.totalorder %s22, 0
      %p56 = por %p54, %p55
      %p57 = scmp.ne.s32.totalorder %s46, %s49
      %p58 = scmp.eq.s32.totalorder %s27, 1
      %p59 = por %p57, %p58
      %p60 = scmp.ne.s32.totalorder %s49, %s50
      %p61 = scmp.eq.s32.totalorder %s27, 0
      %p62 = por %p60, %p61
      %p63 = scmp.ne.s32.totalorder %s49, %s50
      %p64 = scmp.eq.s32.totalorder %s28, 1
      %p65 = por %p63, %p64
      %p67 = scmp.ne.s32.totalorder %s50, %s66
      %p68 = scmp.eq.s32.totalorder %s28, 0
      %p69 = por %p67, %p68
      %s71 = sadd.s32 %s70, 1
      %p74 = scmp.eq.s32.totalorder %s22, 1
      %p75 = scmp.ne.s32.totalorder %s70, %s72
      %p76 = scmp.eq.s32.totalorder %s22, 0
      %p77 = por %p75, %p76
      %p78 = scmp.ne.s32.totalorder %s70, %s72
      %p79 = scmp.eq.s32.totalorder %s27, 1
      %p80 = por %p78, %p79
      %p81 = scmp.ne.s32.totalorder %s72, %s73
      %p82 = scmp.eq.s32.totalorder %s27, 0
      %p83 = por %p81, %p82
      %p84 = scmp.ne.s32.totalorder %s72, %s73
      %p85 = scmp.eq.s32.totalorder %s28, 1
      %p86 = por %p84, %p85
      %p88 = scmp.ne.s32.totalorder %s73, %s87
      %p89 = scmp.eq.s32.totalorder %s28, 0
      %p90 = por %p88, %p89
      %s92 = sadd.s32 %s91, 1
      %p95 = scmp.eq.s32.totalorder %s22, 1
      %p96 = scmp.ne.s32.totalorder %s91, %s93
      %p97 = scmp.eq.s32.totalorder %s22, 0
      %p98 = por %p96, %p97
      %p99 = scmp.ne.s32.totalorder %s91, %s93
      %p100 = scmp.eq.s32.totalorder %s27, 1
      %p101 = por %p99, %p100
      %p102 = scmp.ne.s32.totalorder %s93, %s94
      %p103 = scmp.eq.s32.totalorder %s27, 0
      %p104 = por %p102, %p103
      %p105 = scmp.ne.s32.totalorder %s93, %s94
      %p106 = scmp.eq.s32.totalorder %s28, 1
      %p107 = por %p105, %p106
      %p109 = scmp.ne.s32.totalorder %s94, %s108
      %p110 = scmp.eq.s32.totalorder %s28, 0
      %p111 = por %p109, %p110
      %s113 = sadd.s32 %s112, 1
      %p116 = scmp.eq.s32.totalorder %s22, 1
      %p117 = scmp.ne.s32.totalorder %s112, %s114
      %p118 = scmp.eq.s32.totalorder %s22, 0
      %p119 = por %p117, %p118
      %p120 = scmp.ne.s32.totalorder %s112, %s114
      %p121 = scmp.eq.s32.totalorder %s27, 1
      %p122 = por %p120, %p121
      %p123 = scmp.ne.s32.totalorder %s114, %s115
      %p124 = scmp.eq.s32.totalorder %s27, 0
      %p125 = por %p123, %p124
      %p126 = scmp.ne.s32.totalorder %s114, %s115
      %p127 = scmp.eq.s32.totalorder %s28, 1
      %p128 = por %p126, %p127
      %p130 = scmp.ne.s32.totalorder %s115, %s129
      %p131 = scmp.eq.s32.totalorder %s28, 0
      %p132 = por %p130, %p131
      %s134 = sadd.s32 %s133, 1
      %p137 = scmp.eq.s32.totalorder %s22, 1
      %p138 = scmp.ne.s32.totalorder %s133, %s135
      %p139 = scmp.eq.s32.totalorder %s22, 0
      %p140 = por %p138, %p139
      %p141 = scmp.ne.s32.totalorder %s133, %s135
      %p142 = scmp.eq.s32.totalorder %s27, 1
      %p143 = por %p141, %p142
      %p144 = scmp.ne.s32.totalorder %s135, %s136
      %p145 = scmp.eq.s32.totalorder %s27, 0
      %p146 = por %p144, %p145
      %p147 = scmp.ne.s32.totalorder %s135, %s136
      %p148 = scmp.eq.s32.totalorder %s28, 1
      %p149 = por %p147, %p148
      %p151 = scmp.ne.s32.totalorder %s136, %s150
      %p152 = scmp.eq.s32.totalorder %s28, 0
      %p153 = por %p151, %p152
      %s154 = ssub.s32 %s29, %s41
      %s155 = ssub.s32 %s30, %s37
      %s156 = sor.u32 %s154, %s155
      %p157 = scmp.eq.s32.totalorder %s156, 0
      %s159 = sadd.s32 %s158, 1
      %s160 = scalar_select %p157, %s158, %s159
      %p163 = pneg %p157
      %p164 = scmp.eq.s32.totalorder %s22, 1
      %p165 = por %p163, %p164
      %p166 = scmp.ne.s32.totalorder %s158, %s161
      %p167 = scmp.eq.s32.totalorder %s22, 0
      %p168 = por %p166, %p167
      %p169 = scmp.ne.s32.totalorder %s158, %s161
      %p170 = scmp.eq.s32.totalorder %s27, 1
      %p171 = por %p169, %p170
      %p172 = scmp.ne.s32.totalorder %s161, %s162
      %p173 = scmp.eq.s32.totalorder %s27, 0
      %p174 = por %p172, %p173
      %p175 = scmp.ne.s32.totalorder %s161, %s162
      %p176 = scmp.eq.s32.totalorder %s28, 1
      %p177 = por %p175, %p176
      %p179 = scmp.ne.s32.totalorder %s162, %s178
      %p180 = scmp.eq.s32.totalorder %s28, 0
      %p181 = por %p179, %p180
      %s182 = ssub.s32 %s29, %s41
      %s183 = ssub.s32 %s30, %s37
      %s184 = sor.u32 %s182, %s183
      %p185 = scmp.eq.s32.totalorder %s184, 0
      %s187 = sadd.s32 %s186, 1
      %s188 = scalar_select %p185, %s186, %s187
      %p191 = pneg %p185
      %p192 = scmp.eq.s32.totalorder %s22, 1
      %p193 = por %p191, %p192
      %p194 = scmp.ne.s32.totalorder %s186, %s189
      %p195 = scmp.eq.s32.totalorder %s22, 0
      %p196 = por %p194, %p195
      %p197 = scmp.ne.s32.totalorder %s186, %s189
      %p198 = scmp.eq.s32.totalorder %s27, 1
      %p199 = por %p197, %p198
      %p200 = scmp.ne.s32.totalorder %s189, %s190
      %p201 = scmp.eq.s32.totalorder %s27, 0
      %p202 = por %p200, %p201
      %p203 = scmp.ne.s32.totalorder %s189, %s190
      %p204 = scmp.eq.s32.totalorder %s28, 1
      %p205 = por %p203, %p204
      %p207 = scmp.ne.s32.totalorder %s190, %s206
      %p208 = scmp.eq.s32.totalorder %s28, 0
      %p209 = por %p207, %p208
      %p210 = scmp.le.s32.totalorder 1, %s22
      %p211 = scmp.lt.s32.totalorder %s22, 3
      %p212 = pnand %p210, %p211
      %p213 = pneg %p212
      // Predicated region
      $region9: #{tpu_custom_call.1} parent=5 // pred_check
        _
      $region10: #{tpu_custom_call.1} parent=5 // pred_check_branch
        %215 = sbr.rel (%p212) target = $region12
      $region11: #{tpu_custom_call.1} parent=5 // pred_region
        %s216 = ssub.s32 %s22, 1
        // Predicated region
        $region13: #{tpu_custom_call.1} parent=11 // pred_check
          %p217 = pneg %p83
        $region14: #{tpu_custom_call.1} parent=11 // pred_check_branch
          %219 = sbr.rel (%p217) target = $region16
        $region15: #{tpu_custom_call.1} parent=11 // pred_region
          _
        $region16: #{tpu_custom_call.1} parent=11 // pred_fallthru
          _
        // Predicated region
        $region17: #{tpu_custom_call.1} parent=11 // pred_check
          %p220 = pneg %p104
        $region18: #{tpu_custom_call.1} parent=11 // pred_check_branch
          %222 = sbr.rel (%p220) target = $region20
        $region19: #{tpu_custom_call.1} parent=11 // pred_region
          _
        $region20: #{tpu_custom_call.1} parent=11 // pred_fallthru
          _
        // Predicated region
        $region21: #{tpu_custom_call.1} parent=11 // pred_check
          %p223 = pneg %p125
        $region22: #{tpu_custom_call.1} parent=11 // pred_check_branch
          %225 = sbr.rel (%p223) target = $region24
        $region23: #{tpu_custom_call.1} parent=11 // pred_region
          _
        $region24: #{tpu_custom_call.1} parent=11 // pred_fallthru
          _
        // Predicated region
        $region25: #{tpu_custom_call.1} parent=11 // pred_check
          %p226 = pneg %p146
        $region26: #{tpu_custom_call.1} parent=11 // pred_check_branch
          %228 = sbr.rel (%p226) target = $region28
        $region27: #{tpu_custom_call.1} parent=11 // pred_region
          _
        $region28: #{tpu_custom_call.1} parent=11 // pred_fallthru
          _
      $region12: #{tpu_custom_call.1} parent=5 // pred_fallthru
        _
      %p229 = scmp.lt.s32.totalorder %s22, 2
      // Predicated region
      $region29: #{tpu_custom_call.1} parent=5 // pred_check
        %p230 = pneg %p229
      $region30: #{tpu_custom_call.1} parent=5 // pred_check_branch
        %232 = sbr.rel (%p230) target = $region32
      $region31: #{tpu_custom_call.1} parent=5 // pred_region
        // Predicated region
        $region33: #{tpu_custom_call.1} parent=31 // pred_check
          %p233 = pneg %p56
        $region34: #{tpu_custom_call.1} parent=31 // pred_check_branch
          %235 = sbr.rel (%p233) target = $region36
        $region35: #{tpu_custom_call.1} parent=31 // pred_region
          %s236 = sand.u32 %s46, 1
          %s237 = scalar_lea.sflag [#allocation3], %s236
          %s238 = sand.u32 %s46, 1
          %s239 = smul.addr %s238, 16
          %s240 = scalar_lea.vmem [#allocation2], %s239
          %s241 = smul.u32 2, %s30
          %s243 = ssub.s32 256, 256
          %244 = vsyncadd %s237, %s243
          %s245 = smul.addr %s29, 2
          %s246 = sadd.s32 %s241, %s245
          %s247 = smul.addr %s246, 128
          %s248 = scalar_lea.hbm %s0, %s247
          %s250 = sshll.u32 %s240, 4
          %s251 = int_to_ptr.vmem [resolvable:$true] %s250
          %253 = dma.hbm_to_vmem [thread:$0]  %s248, 256, %s251, %s237
        $region36: #{tpu_custom_call.1} parent=31 // pred_fallthru
          _
      $region32: #{tpu_custom_call.1} parent=5 // pred_fallthru
        _
      %p254 = scmp.le.s32.totalorder 1, %s22
      %p255 = scmp.lt.s32.totalorder %s22, 3
      %p256 = pnand %p254, %p255
      %p257 = pneg %p256
      // Predicated region
      $region37: #{tpu_custom_call.1} parent=5 // pred_check
        _
      $region38: #{tpu_custom_call.1} parent=5 // pred_check_branch
        %259 = sbr.rel (%p256) target = $region40
      $region39: #{tpu_custom_call.1} parent=5 // pred_region
        %s260 = ssub.s32 %s22, 1
        %s261 = sand.u32 %s49, 1
        %s262 = scalar_lea.sflag [#allocation3], %s261
        %s263 = sand.u32 %s49, 1
        %s264 = smul.addr %s263, 16
        %s265 = scalar_lea.vmem [#allocation2], %s264
        // Predicated region
        $region41: #{tpu_custom_call.1} parent=39 // pred_check
          %p266 = pneg %p62
        $region42: #{tpu_custom_call.1} parent=39 // pred_check_branch
          %268 = sbr.rel (%p266) target = $region44
        $region43: #{tpu_custom_call.1} parent=39 // pred_region
          %269 = dma.done %s262, 256
        $region44: #{tpu_custom_call.1} parent=39 // pred_fallthru
          _
        %s270 = sand.u32 %s49, 1
        %s271 = scalar_lea.sflag [#allocation3], %s270
        %s272 = sand.u32 %s49, 1
        %s273 = smul.addr %s272, 16
        %s274 = scalar_lea.vmem [#allocation2], %s273
        %p275 = pneg %p62
        %p276 = pneg %p59
        %p277 = pneg %p83
        %p278 = pneg %p80
        %p279 = pneg %p104
        %p280 = pneg %p101
        %p281 = pneg %p125
        %p282 = pneg %p122
        %p283 = pneg %p146
        %p284 = pneg %p143
        %p285 = pneg %p174
        %p286 = pneg %p171
        %s287 = sand.u32 %s161, 1
        %s288 = scalar_lea.sflag [#allocation4], %s287
        %s289 = sand.u32 %s161, 1
        %s290 = smul.addr %s289, 16
        %s291 = scalar_lea.vmem [#allocation5], %s290
        %p292 = pneg %p202
        %p293 = pneg %p199
        %s294 = sand.u32 %s189, 1
        %s295 = scalar_lea.sflag [#allocation7], %s294
        %s296 = sand.u32 %s189, 1
        %s297 = smul.addr %s296, 16
        %s298 = scalar_lea.vmem [#allocation6], %s297
        %s299 = smul.u32 2, %s32
        %s300 = smul.u32 2, %s32
        %s301 = smul.u32 2, %s32
        %v302 = vld [vmem:[%s265] sm:$0xff]
        %v303 = vld [vmem:[%s265 + $0x8] sm:$0xff]
        %v304 = vld [vmem:[%s1] sm:$0xff]
        %v305 = vld [vmem:[%s3] sm:$0xff]
        %307 = vset.pattern.permute.xlu0 0
        %308 = vperm.xlu0 %307, %v305
        %v309 = vpop.permute.xlu0 %308
        %vm311 = vcmask 64512
        %v313 = vsel %vm311, %v304, 0
        %315 = vmatprep.subr.mxu0 %v303
        %316 = vmatpush1.msra.mxu0 %v302
        %317 = vmatprep.subr.mxu0 0.0
        %318 = vmatpush1.msra.mxu0 0.0
        %319 = vmatprep.subr.mxu0 0.0
        %320 = vmatpush1.msra.mxu0 0.0
        %321 = vmatprep.subr.mxu0 0.0
        %322 = vmatpush1.msra.mxu0 0.0
        %323 = vmatprep.subr.mxu0 0.0
        %324 = vmatpush1.msra.mxu0 0.0
        %325 = vmatprep.subr.mxu0 0.0
        %326 = vmatpush1.msra.mxu0 0.0
        %327 = vmatprep.subr.mxu0 0.0
        %328 = vmatpush1.msra.mxu0 0.0
        %329 = vmatprep.subr.mxu0 0.0
        %330 = vmatpush1.msra.mxu0 0.0
        %331 = vmatprep.subr.mxu0 0.0
        %332 = vmatpush1.msra.mxu0 0.0
        %333 = vmatprep.subr.mxu0 0.0
        %334 = vmatpush1.msra.mxu0 0.0
        %335 = vmatprep.subr.mxu0 0.0
        %336 = vmatpush1.msra.mxu0 0.0
        %337 = vmatprep.subr.mxu0 0.0
        %338 = vmatpush1.msra.mxu0 0.0
        %339 = vmatprep.subr.mxu0 0.0
        %340 = vmatpush1.msra.mxu0 0.0
        %341 = vmatprep.subr.mxu0 0.0
        %342 = vmatpush1.msra.mxu0 0.0
        %343 = vmatprep.subr.mxu0 0.0
        %344 = vmatpush1.msra.mxu0 0.0
        %345 = vmatprep.subr.mxu0 0.0
        %346 = vmatpush1.msra.mxu0 0.0
        %347 = vmatprep.subr.mxu0 0.0
        %348 = vmatpush1.msra.mxu0 0.0
        %349 = vmatprep.subr.mxu0 0.0
        %350 = vmatpush1.msra.mxu0 0.0
        %351 = vmatprep.subr.mxu0 0.0
        %352 = vmatpush1.msra.mxu0 0.0
        %353 = vmatprep.subr.mxu0 0.0
        %354 = vmatpush1.msra.mxu0 0.0
        %355 = vmatprep.subr.mxu0 0.0
        %356 = vmatpush1.msra.mxu0 0.0
        %357 = vmatprep.subr.mxu0 0.0
        %358 = vmatpush1.msra.mxu0 0.0
        %359 = vmatprep.subr.mxu0 0.0
        %360 = vmatpush1.msra.mxu0 0.0
        %361 = vmatprep.subr.mxu0 0.0
        %362 = vmatpush1.msra.mxu0 0.0
        %363 = vmatprep.subr.mxu0 0.0
        %364 = vmatpush1.msra.mxu0 0.0
        %365 = vmatprep.subr.mxu0 0.0
        %366 = vmatpush1.msra.mxu0 0.0
        %367 = vmatprep.subr.mxu0 0.0
        %368 = vmatpush1.msra.mxu0 0.0
        %369 = vmatprep.subr.mxu0 0.0
        %370 = vmatpush1.msra.mxu0 0.0
        %371 = vmatprep.subr.mxu0 0.0
        %372 = vmatpush1.msra.mxu0 0.0
        %373 = vmatprep.subr.mxu0 0.0
        %374 = vmatpush1.msra.mxu0 0.0
        %375 = vmatprep.subr.mxu0 0.0
        %376 = vmatpush1.msra.mxu0 0.0
        %377 = vmatprep.subr.mxu0 0.0
        %378 = vmatpush1.msra.mxu0 0.0
        %379 = vmatprep.mubr.f32.mxu0 0.0
        %380 = vmatmul.mubr.f32.gmra.mrb[0].mxu0 %v313
        %v381 = vpop.f32.mrb[0].mxu0
        %v382 = vadd.f32 %v309, %v381
        %v383 = vpop.f32.mrb[0].mxu0
        %v384 = vadd.f32 %v309, %v383
        %385 = vdwg.mxu0
        %v386 = vld [vmem:[%s2] sm:$0xff]
        %v387 = vld [vmem:[%s4] sm:$0xff]
        %389 = vset.pattern.permute.xlu0 0
        %390 = vperm.xlu0 %389, %v387
        %v391 = vpop.permute.xlu0 %390
        %v394 = vsel %vm311, %v386, 0
        %396 = vmatprep.subr.mxu0 %v303
        %397 = vmatpush1.msra.mxu0 %v302
        %398 = vmatprep.subr.mxu0 0.0
        %399 = vmatpush1.msra.mxu0 0.0
        %400 = vmatprep.subr.mxu0 0.0
        %401 = vmatpush1.msra.mxu0 0.0
        %402 = vmatprep.subr.mxu0 0.0
        %403 = vmatpush1.msra.mxu0 0.0
        %404 = vmatprep.subr.mxu0 0.0
        %405 = vmatpush1.msra.mxu0 0.0
        %406 = vmatprep.subr.mxu0 0.0
        %407 = vmatpush1.msra.mxu0 0.0
        %408 = vmatprep.subr.mxu0 0.0
        %409 = vmatpush1.msra.mxu0 0.0
        %410 = vmatprep.subr.mxu0 0.0
        %411 = vmatpush1.msra.mxu0 0.0
        %412 = vmatprep.subr.mxu0 0.0
        %413 = vmatpush1.msra.mxu0 0.0
        %414 = vmatprep.subr.mxu0 0.0
        %415 = vmatpush1.msra.mxu0 0.0
        %416 = vmatprep.subr.mxu0 0.0
        %417 = vmatpush1.msra.mxu0 0.0
        %418 = vmatprep.subr.mxu0 0.0
        %419 = vmatpush1.msra.mxu0 0.0
        %420 = vmatprep.subr.mxu0 0.0
        %421 = vmatpush1.msra.mxu0 0.0
        %422 = vmatprep.subr.mxu0 0.0
        %423 = vmatpush1.msra.mxu0 0.0
        %424 = vmatprep.subr.mxu0 0.0
        %425 = vmatpush1.msra.mxu0 0.0
        %426 = vmatprep.subr.mxu0 0.0
        %427 = vmatpush1.msra.mxu0 0.0
        %428 = vmatprep.subr.mxu0 0.0
        %429 = vmatpush1.msra.mxu0 0.0
        %430 = vmatprep.subr.mxu0 0.0
        %431 = vmatpush1.msra.mxu0 0.0
        %432 = vmatprep.subr.mxu0 0.0
        %433 = vmatpush1.msra.mxu0 0.0
        %434 = vmatprep.subr.mxu0 0.0
        %435 = vmatpush1.msra.mxu0 0.0
        %436 = vmatprep.subr.mxu0 0.0
        %437 = vmatpush1.msra.mxu0 0.0
        %438 = vmatprep.subr.mxu0 0.0
        %439 = vmatpush1.msra.mxu0 0.0
        %440 = vmatprep.subr.mxu0 0.0
        %441 = vmatpush1.msra.mxu0 0.0
        %442 = vmatprep.subr.mxu0 0.0
        %443 = vmatpush1.msra.mxu0 0.0
        %444 = vmatprep.subr.mxu0 0.0
        %445 = vmatpush1.msra.mxu0 0.0
        %446 = vmatprep.subr.mxu0 0.0
        %447 = vmatpush1.msra.mxu0 0.0
        %448 = vmatprep.subr.mxu0 0.0
        %449 = vmatpush1.msra.mxu0 0.0
        %450 = vmatprep.subr.mxu0 0.0
        %451 = vmatpush1.msra.mxu0 0.0
        %452 = vmatprep.subr.mxu0 0.0
        %453 = vmatpush1.msra.mxu0 0.0
        %454 = vmatprep.subr.mxu0 0.0
        %455 = vmatpush1.msra.mxu0 0.0
        %456 = vmatprep.subr.mxu0 0.0
        %457 = vmatpush1.msra.mxu0 0.0
        %458 = vmatprep.subr.mxu0 0.0
        %459 = vmatpush1.msra.mxu0 0.0
        %460 = vmatprep.mubr.f32.mxu0 0.0
        %461 = vmatmul.mubr.f32.gmra.mrb[0].mxu0 %v394
        %v462 = vpop.f32.mrb[0].mxu0
        %v463 = vadd.f32 %v391, %v462
        %v464 = vpop.f32.mrb[0].mxu0
        %v465 = vadd.f32 %v391, %v464
        %466 = vdwg.mxu0
        %467 = vst [vmem:[%s291] sm:$0xff] %v382
        %468 = vst [vmem:[%s291 + $0x8] sm:$0xff] %v384
        %469 = vst [vmem:[%s298] sm:$0xff] %v463
        %470 = vst [vmem:[%s298 + $0x8] sm:$0xff] %v465
        %s471 = sand.u32 %s161, 1
        %s472 = scalar_lea.sflag [#allocation4], %s471
        %s473 = sand.u32 %s161, 1
        %s474 = smul.addr %s473, 16
        %s475 = scalar_lea.vmem [#allocation5], %s474
        %s476 = sand.u32 %s189, 1
        %s477 = scalar_lea.sflag [#allocation7], %s476
        %s478 = sand.u32 %s189, 1
        %s479 = smul.addr %s478, 16
        %s480 = scalar_lea.vmem [#allocation6], %s479
        // Predicated region
        $region45: #{tpu_custom_call.1} parent=39 // pred_check
          %p481 = pneg %p171
        $region46: #{tpu_custom_call.1} parent=39 // pred_check_branch
          %483 = sbr.rel (%p481) target = $region48
        $region47: #{tpu_custom_call.1} parent=39 // pred_region
          %s484 = smul.u32 2, %s32
          %s486 = ssub.s32 256, 256
          %487 = vsyncadd %s472, %s486
          %s488 = smul.addr %s31, 2
          %s489 = sadd.s32 %s484, %s488
          %s490 = smul.addr %s489, 128
          %s491 = scalar_lea.hbm %s5, %s490
          %s493 = sshll.u32 %s475, 4
          %s494 = int_to_ptr.vmem [resolvable:$true] %s493
          %496 = dma.vmem_to_hbm [thread:$0]  %s494, 256, %s491, %s472
        $region48: #{tpu_custom_call.1} parent=39 // pred_fallthru
          _
        // Predicated region
        $region49: #{tpu_custom_call.1} parent=39 // pred_check
          %p497 = pneg %p199
        $region50: #{tpu_custom_call.1} parent=39 // pred_check_branch
          %499 = sbr.rel (%p497) target = $region52
        $region51: #{tpu_custom_call.1} parent=39 // pred_region
          %s500 = smul.u32 2, %s32
          %s502 = ssub.s32 256, 256
          %503 = vsyncadd %s477, %s502
          %s504 = smul.addr %s31, 2
          %s505 = sadd.s32 %s500, %s504
          %s506 = smul.addr %s505, 128
          %s507 = scalar_lea.hbm %s6, %s506
          %s509 = sshll.u32 %s480, 4
          %s510 = int_to_ptr.vmem [resolvable:$true] %s509
          %512 = dma.vmem_to_hbm [thread:$0]  %s510, 256, %s507, %s477
        $region52: #{tpu_custom_call.1} parent=39 // pred_fallthru
          _
      $region40: #{tpu_custom_call.1} parent=5 // pred_fallthru
        _
      %p513 = scmp.le.s32.totalorder 2, %s22
      // Predicated region
      $region53: #{tpu_custom_call.1} parent=5 // pred_check
        %p514 = pneg %p513
      $region54: #{tpu_custom_call.1} parent=5 // pred_check_branch
        %516 = sbr.rel (%p514) target = $region56
      $region55: #{tpu_custom_call.1} parent=5 // pred_region
        %s517 = ssub.s32 %s22, 2
        // Predicated region
        $region57: #{tpu_custom_call.1} parent=55 // pred_check
          %p518 = pneg %p177
        $region58: #{tpu_custom_call.1} parent=55 // pred_check_branch
          %520 = sbr.rel (%p518) target = $region60
        $region59: #{tpu_custom_call.1} parent=55 // pred_region
          %s521 = sand.u32 %s162, 1
          %s522 = scalar_lea.sflag [#allocation4], %s521
          %s523 = sand.u32 %s162, 1
          %s524 = smul.addr %s523, 16
          %s525 = scalar_lea.vmem [#allocation5], %s524
          %526 = dma.done %s522, 256
        $region60: #{tpu_custom_call.1} parent=55 // pred_fallthru
          _
        // Predicated region
        $region61: #{tpu_custom_call.1} parent=55 // pred_check
          %p527 = pneg %p205
        $region62: #{tpu_custom_call.1} parent=55 // pred_check_branch
          %529 = sbr.rel (%p527) target = $region64
        $region63: #{tpu_custom_call.1} parent=55 // pred_region
          %s530 = sand.u32 %s190, 1
          %s531 = scalar_lea.sflag [#allocation7], %s530
          %s532 = sand.u32 %s190, 1
          %s533 = smul.addr %s532, 16
          %s534 = scalar_lea.vmem [#allocation6], %s533
          %535 = dma.done %s531, 256
        $region64: #{tpu_custom_call.1} parent=55 // pred_fallthru
          _
      $region56: #{tpu_custom_call.1} parent=5 // pred_fallthru
        _
    $region6: #{tpu_custom_call.1} parent=1 // loop_footer
      %s26 = sadd.s32 1, %s22
    $region7: #{tpu_custom_call.1} parent=1 // loop_footer_branch
      %21 = sbr.rel target = $region3
    $region8: #{tpu_custom_call.1} parent=1 // loop_exit
      _
    %536 = vsyncpa [#allocation3], 1
    %s537 = scalar_lea.sflag [#allocation3], 1
    %538 = vsyncpa %s537, 1
    %539 = vsyncpa [#allocation4], 1
    %s540 = scalar_lea.sflag [#allocation4], 1
    %541 = vsyncpa %s540, 1
    %542 = vsyncpa [#allocation7], 1
    %s543 = scalar_lea.sflag [#allocation7], 1
    %544 = vsyncpa %s543, 1

</llo_original>
